<compile_context>
chip_gen: v7x
topology: tpu7x:2x2x1
jax: 0.10.0
libtpu: 0.0.40
codegen_flags: <defaults>
</compile_context>

<pallas_src>
import functools

import jax
import jax.numpy as jnp
from jax.experimental import pallas as pl
from jax.experimental.pallas import tpu as pltpu

NODES = (64, 64, 64)


def _log_sigmoid(z):
    # Numerically stable logsigmoid(z) = min(z, 0) - log1p(exp(-|z|)).
    return jnp.minimum(z, 0.0) - jnp.log1p(jnp.exp(-jnp.abs(z)))


def _score_kernel(xt_ref, w1_ref, w2_ref, w3_ref, w4_ref, b123_ref, b4_ref,
                  o_ref):
    """Fused 4-layer MLP on batch->lane packed activations.

    xt_ref : (bb, (n+1)*P) packed [x|t] rows (float32)
    wK_ref : block-diagonal kron(I_P, W_K) weights
    b123   : rows 0/1/2 hold the P-tiled biases of layers 1/2/3
    o_ref  : (bb, n*P) packed output
    """
    xt = xt_ref[...].astype(jnp.float32)   # x = x.float()

    h = jnp.dot(xt, w1_ref[...], preferred_element_type=jnp.float32)
    h = _log_sigmoid(h + b123_ref[0:1, :])
    h = jnp.dot(h, w2_ref[...], preferred_element_type=jnp.float32)
    h = _log_sigmoid(h + b123_ref[1:2, :])
    h = jnp.dot(h, w3_ref[...], preferred_element_type=jnp.float32)
    h = _log_sigmoid(h + b123_ref[2:3, :])
    out = jnp.dot(h, w4_ref[...], preferred_element_type=jnp.float32) + b4_ref[...]

    o_ref[...] = out.astype(o_ref.dtype)


def default_pack_factor():
    """P=4 fills the 256-wide v6e/v7x MXU; P=2 the 128-wide v5e (and older)."""
    try:
        kind = jax.devices()[0].device_kind.lower()
    except Exception:
        return 4
    if "v6" in kind or "v7" in kind or "tpu7" in kind:
        return 4
    return 2


def init_score_params(key, n):
    """Deterministic params matching nn.Linear shapes (stored transposed)."""
    dims = [n + 1, NODES[0], NODES[1], NODES[2], n]
    params = []
    for i in range(4):
        fan_in, fan_out = dims[i], dims[i + 1]
        key, kw, kb = jax.random.split(key, 3)
        bound = 1.0 / jnp.sqrt(jnp.float32(fan_in))
        w = jax.random.uniform(kw, (fan_in, fan_out), jnp.float32, -bound, bound)
        b = jax.random.uniform(kb, (1, fan_out), jnp.float32, -bound, bound)
        params.append((w, b))
    return params


def pack_score_params(params, pack):
    """Build block-diagonal (lane-packed) weights and tiled biases, once."""
    (w1, b1), (w2, b2), (w3, b3), (w4, b4) = params
    eye = jnp.eye(pack, dtype=jnp.float32)
    w1p = jnp.kron(eye, w1.astype(jnp.float32))          # ((n+1)P, 64P)
    w2p = jnp.kron(eye, w2.astype(jnp.float32))          # (64P, 64P)
    w3p = jnp.kron(eye, w3.astype(jnp.float32))          # (64P, 64P)
    w4p = jnp.kron(eye, w4.astype(jnp.float32))          # (64P, nP)
    b123 = jnp.concatenate(
        [jnp.tile(b1.astype(jnp.float32), (1, pack)),
         jnp.tile(b2.astype(jnp.float32), (1, pack)),
         jnp.tile(b3.astype(jnp.float32), (1, pack))], axis=0)   # (3, 64P)
    b4p = jnp.tile(b4.astype(jnp.float32), (1, pack))            # (1, nP)
    return (w1p, w2p, w3p, w4p, b123, b4p)


@functools.partial(jax.jit, static_argnames=("pack", "block_rows"))
def score_forward(x, t, packed_params, *, pack, block_rows=2048):
    """x: (B, n), t: (B, 1) -> (B, n), fused in a single Pallas kernel."""
    B, n = x.shape
    w1p, w2p, w3p, w4p, b123, b4p = packed_params
    in_w = (n + 1) * pack
    out_w = n * pack

    # Merge t into the x stream (single fused concat+cast; no separate
    # lane-padded t block, no VPU broadcast in the kernel).
    xt = jnp.concatenate([x, t], axis=-1).astype(jnp.float32)   # (B, n+1)

    # Pad only when B is not a multiple of the packing factor (<= pack-1 rows).
    pad = (-B) % pack
    if pad:
        xt = jnp.pad(xt, ((0, pad), (0, 0)))
    Bp = B + pad
    R = Bp // pack

    # Free row-major reshape: P batch rows packed into the lane axis.
    xt = xt.reshape(R, in_w)

    # Row-block size: as large as possible (amortize per-step overhead), but
    # at most ~R/2 so there are >=2 blocks for the two v7x TensorCores.
    br8 = max(8, (block_rows // 8) * 8)
    if R <= 8:
        bb = R                                # single full-extent block
    else:
        half8 = -(-(-(-R // 2)) // 8) * 8     # round_up8(ceil(R/2))
        bb = max(8, min(br8, half8))
    num_blocks = -(-R // bb)                  # partial last block handled by Pallas

    batch_map = lambda i: (i, 0)
    const_map = lambda i: (0, 0)
    full_spec = lambda a: pl.BlockSpec(a.shape, const_map)

    out = pl.pallas_call(
        _score_kernel,
        out_shape=jax.ShapeDtypeStruct((R, out_w), jnp.float32),
        grid=(num_blocks,),
        in_specs=[
            pl.BlockSpec((bb, in_w), batch_map),
            full_spec(w1p), full_spec(w2p), full_spec(w3p), full_spec(w4p),
            full_spec(b123), full_spec(b4p),
        ],
        out_specs=pl.BlockSpec((bb, out_w), batch_map),
        compiler_params=pltpu.CompilerParams(
            dimension_semantics=("parallel",)),
    )(xt, w1p, w2p, w3p, w4p, b123, b4p)

    out = out.reshape(Bp, n)                  # free row-major unpack
    return out[:B] if pad else out


def score_reference(x, t, params):
    """Pure-JAX reference of the torch forward, for verification."""
    h = jnp.concatenate((x, t), axis=-1).astype(jnp.float32)
    (w1, b1), (w2, b2), (w3, b3), (w4, b4) = params
    hp = jax.lax.Precision.HIGHEST
    h = jax.nn.log_sigmoid(jnp.dot(h, w1, precision=hp) + b1)
    h = jax.nn.log_sigmoid(jnp.dot(h, w2, precision=hp) + b2)
    h = jax.nn.log_sigmoid(jnp.dot(h, w3, precision=hp) + b3)
    return jnp.dot(h, w4, precision=hp) + b4


if __name__ == "__main__":
    n = 4  # score dimension (module arg `n`)

    key = jax.random.PRNGKey(0)
    kp, kx, kt = jax.random.split(key, 3)
    params = init_score_params(kp, n)

    pack = default_pack_factor()
    packed = pack_score_params(params, pack)

    # Case 1: tiny batch -> single full-extent block.
    x1 = jax.random.normal(kx, (8, n), jnp.float32)
    t1 = jax.random.uniform(kt, (8, 1), jnp.float32)
    out1 = jax.block_until_ready(score_forward(x1, t1, packed, pack=pack))
    ref1 = score_reference(x1, t1, params)
    assert out1.shape == (8, n)
    assert jnp.allclose(out1, ref1, atol=1e-4, rtol=1e-4), "mismatch (case 1)"

    # Case 2: batch not divisible by pack or by the row tile -> pack padding,
    # multi-block grid with a partial last block, and output slicing.
    kx2, kt2 = jax.random.split(kx)
    x2 = jax.random.normal(kx2, (201, n), jnp.float32)
    t2 = jax.random.uniform(kt2, (201, 1), jnp.float32)
    out2 = jax.block_until_ready(
        score_forward(x2, t2, packed, pack=pack, block_rows=8))
    ref2 = score_reference(x2, t2, params)
    assert out2.shape == (201, n)
    assert jnp.allclose(out2, ref2, atol=1e-4, rtol=1e-4), "mismatch (case 2)"

    print("KERNEL_OK")
</pallas_src>

<mosaic_0001>
module attributes {stable_mosaic.version = 11 : i64} {
  func.func @_score_kernel(%arg0: i32, %arg1: memref<4x10xf32, #tpu.memory_space<vmem>>, %arg2: memref<10x128xf32, #tpu.memory_space<vmem>>, %arg3: memref<128x128xf32, #tpu.memory_space<vmem>>, %arg4: memref<128x128xf32, #tpu.memory_space<vmem>>, %arg5: memref<128x8xf32, #tpu.memory_space<vmem>>, %arg6: memref<3x128xf32, #tpu.memory_space<vmem>>, %arg7: memref<1x8xf32, #tpu.memory_space<vmem>>, %arg8: memref<4x8xf32, #tpu.memory_space<vmem>>) attributes {dimension_semantics = [#tpu.dimension_semantics<parallel>], iteration_bounds = array<i64: 1>, scalar_prefetch = 0 : i64, scratch_operands = 0 : i64, tpu.core_type = #tpu.core_type<tc>, window_params = [{transform_indices = @transform_0, window_bounds = array<i64: 4, 10>}, {pipeline_mode = #tpu.pipeline_mode<synchronous>, transform_indices = @transform_1, window_bounds = array<i64: 10, 128>}, {pipeline_mode = #tpu.pipeline_mode<synchronous>, transform_indices = @transform_2, window_bounds = array<i64: 128, 128>}, {pipeline_mode = #tpu.pipeline_mode<synchronous>, transform_indices = @transform_3, window_bounds = array<i64: 128, 128>}, {pipeline_mode = #tpu.pipeline_mode<synchronous>, transform_indices = @transform_4, window_bounds = array<i64: 128, 8>}, {pipeline_mode = #tpu.pipeline_mode<synchronous>, transform_indices = @transform_5, window_bounds = array<i64: 3, 128>}, {pipeline_mode = #tpu.pipeline_mode<synchronous>, transform_indices = @transform_6, window_bounds = array<i64: 1, 8>}, {transform_indices = @transform_7, window_bounds = array<i64: 4, 8>}]} {
    %c0 = arith.constant 0 : index
    %c0_0 = arith.constant 0 : index
    %0 = vector.load %arg1[%c0, %c0_0] : memref<4x10xf32, #tpu.memory_space<vmem>>, vector<4x10xf32>
    %c0_1 = arith.constant 0 : index
    %c0_2 = arith.constant 0 : index
    %1 = vector.load %arg2[%c0_1, %c0_2] : memref<10x128xf32, #tpu.memory_space<vmem>>, vector<10x128xf32>
    %cst = arith.constant dense<0.000000e+00> : vector<4x128xf32>
    %2 = tpu.matmul %0, %1, %cst {dimension_numbers = #tpu.dot_dimension_numbers<[1], [0], [0], [1], [0, 0, 1, 1], [], []>} : vector<4x10xf32>, vector<10x128xf32>, vector<4x128xf32> -> vector<4x128xf32>
    %c0_3 = arith.constant 0 : index
    %c0_4 = arith.constant 0 : index
    %3 = vector.load %arg6[%c0_3, %c0_4] : memref<3x128xf32, #tpu.memory_space<vmem>>, vector<1x128xf32>
    %4 = vector.broadcast %3 : vector<1x128xf32> to vector<4x128xf32>
    %5 = arith.addf %2, %4 : vector<4x128xf32>
    %cst_5 = arith.constant 0.000000e+00 : f32
    %6 = vector.broadcast %cst_5 : f32 to vector<4x128xf32>
    %7 = arith.minimumf %5, %6 : vector<4x128xf32>
    %8 = math.absf %5 : vector<4x128xf32>
    %cst_6 = arith.constant 0.000000e+00 : f32
    %9 = vector.broadcast %cst_6 : f32 to vector<4x128xf32>
    %10 = arith.subf %9, %8 : vector<4x128xf32>
    %11 = math.exp %10 : vector<4x128xf32>
    %12 = math.log1p %11 : vector<4x128xf32>
    %13 = arith.subf %7, %12 : vector<4x128xf32>
    %c0_7 = arith.constant 0 : index
    %c0_8 = arith.constant 0 : index
    %14 = vector.load %arg3[%c0_7, %c0_8] : memref<128x128xf32, #tpu.memory_space<vmem>>, vector<128x128xf32>
    %cst_9 = arith.constant dense<0.000000e+00> : vector<4x128xf32>
    %15 = tpu.matmul %13, %14, %cst_9 {dimension_numbers = #tpu.dot_dimension_numbers<[1], [0], [0], [1], [0, 0, 1, 1], [], []>} : vector<4x128xf32>, vector<128x128xf32>, vector<4x128xf32> -> vector<4x128xf32>
    %c1 = arith.constant 1 : index
    %c0_10 = arith.constant 0 : index
    %16 = vector.load %arg6[%c1, %c0_10] : memref<3x128xf32, #tpu.memory_space<vmem>>, vector<1x128xf32>
    %17 = vector.broadcast %16 : vector<1x128xf32> to vector<4x128xf32>
    %18 = arith.addf %15, %17 : vector<4x128xf32>
    %cst_11 = arith.constant 0.000000e+00 : f32
    %19 = vector.broadcast %cst_11 : f32 to vector<4x128xf32>
    %20 = arith.minimumf %18, %19 : vector<4x128xf32>
    %21 = math.absf %18 : vector<4x128xf32>
    %cst_12 = arith.constant 0.000000e+00 : f32
    %22 = vector.broadcast %cst_12 : f32 to vector<4x128xf32>
    %23 = arith.subf %22, %21 : vector<4x128xf32>
    %24 = math.exp %23 : vector<4x128xf32>
    %25 = math.log1p %24 : vector<4x128xf32>
    %26 = arith.subf %20, %25 : vector<4x128xf32>
    %c0_13 = arith.constant 0 : index
    %c0_14 = arith.constant 0 : index
    %27 = vector.load %arg4[%c0_13, %c0_14] : memref<128x128xf32, #tpu.memory_space<vmem>>, vector<128x128xf32>
    %cst_15 = arith.constant dense<0.000000e+00> : vector<4x128xf32>
    %28 = tpu.matmul %26, %27, %cst_15 {dimension_numbers = #tpu.dot_dimension_numbers<[1], [0], [0], [1], [0, 0, 1, 1], [], []>} : vector<4x128xf32>, vector<128x128xf32>, vector<4x128xf32> -> vector<4x128xf32>
    %c2 = arith.constant 2 : index
    %c0_16 = arith.constant 0 : index
    %29 = vector.load %arg6[%c2, %c0_16] : memref<3x128xf32, #tpu.memory_space<vmem>>, vector<1x128xf32>
    %30 = vector.broadcast %29 : vector<1x128xf32> to vector<4x128xf32>
    %31 = arith.addf %28, %30 : vector<4x128xf32>
    %cst_17 = arith.constant 0.000000e+00 : f32
    %32 = vector.broadcast %cst_17 : f32 to vector<4x128xf32>
    %33 = arith.minimumf %31, %32 : vector<4x128xf32>
    %34 = math.absf %31 : vector<4x128xf32>
    %cst_18 = arith.constant 0.000000e+00 : f32
    %35 = vector.broadcast %cst_18 : f32 to vector<4x128xf32>
    %36 = arith.subf %35, %34 : vector<4x128xf32>
    %37 = math.exp %36 : vector<4x128xf32>
    %38 = math.log1p %37 : vector<4x128xf32>
    %39 = arith.subf %33, %38 : vector<4x128xf32>
    %c0_19 = arith.constant 0 : index
    %c0_20 = arith.constant 0 : index
    %40 = vector.load %arg5[%c0_19, %c0_20] : memref<128x8xf32, #tpu.memory_space<vmem>>, vector<128x8xf32>
    %cst_21 = arith.constant dense<0.000000e+00> : vector<4x8xf32>
    %41 = tpu.matmul %39, %40, %cst_21 {dimension_numbers = #tpu.dot_dimension_numbers<[1], [0], [0], [1], [0, 0, 1, 1], [], []>} : vector<4x128xf32>, vector<128x8xf32>, vector<4x8xf32> -> vector<4x8xf32>
    %c0_22 = arith.constant 0 : index
    %c0_23 = arith.constant 0 : index
    %42 = vector.load %arg7[%c0_22, %c0_23] : memref<1x8xf32, #tpu.memory_space<vmem>>, vector<1x8xf32>
    %43 = vector.broadcast %42 : vector<1x8xf32> to vector<4x8xf32>
    %44 = arith.addf %41, %43 : vector<4x8xf32>
    %c0_24 = arith.constant 0 : index
    %c0_25 = arith.constant 0 : index
    %45 = vector.load %arg8[%c0_24, %c0_25] : memref<4x8xf32, #tpu.memory_space<vmem>>, vector<4x8xf32>
    tpu.vector_store %arg8[%c0_24, %c0_25], %44 {strides = array<i32>} : memref<4x8xf32, #tpu.memory_space<vmem>>, vector<4x8xf32>,
    return
  }
  func.func @transform_0(%arg0: i32) -> (i32, i32) {
    %c0_i32 = arith.constant 0 : i32
    %c0_i32_0 = arith.constant 0 : i32
    return %arg0, %c0_i32 : i32, i32
  }
  func.func @transform_1(%arg0: i32) -> (i32, i32) {
    %c0_i32 = arith.constant 0 : i32
    %c0_i32_0 = arith.constant 0 : i32
    %c0_i32_1 = arith.constant 0 : i32
    return %c0_i32, %c0_i32_0 : i32, i32
  }
  func.func @transform_2(%arg0: i32) -> (i32, i32) {
    %c0_i32 = arith.constant 0 : i32
    %c0_i32_0 = arith.constant 0 : i32
    %c0_i32_1 = arith.constant 0 : i32
    return %c0_i32, %c0_i32_0 : i32, i32
  }
  func.func @transform_3(%arg0: i32) -> (i32, i32) {
    %c0_i32 = arith.constant 0 : i32
    %c0_i32_0 = arith.constant 0 : i32
    %c0_i32_1 = arith.constant 0 : i32
    return %c0_i32, %c0_i32_0 : i32, i32
  }
  func.func @transform_4(%arg0: i32) -> (i32, i32) {
    %c0_i32 = arith.constant 0 : i32
    %c0_i32_0 = arith.constant 0 : i32
    %c0_i32_1 = arith.constant 0 : i32
    return %c0_i32, %c0_i32_0 : i32, i32
  }
  func.func @transform_5(%arg0: i32) -> (i32, i32) {
    %c0_i32 = arith.constant 0 : i32
    %c0_i32_0 = arith.constant 0 : i32
    %c0_i32_1 = arith.constant 0 : i32
    return %c0_i32, %c0_i32_0 : i32, i32
  }
  func.func @transform_6(%arg0: i32) -> (i32, i32) {
    %c0_i32 = arith.constant 0 : i32
    %c0_i32_0 = arith.constant 0 : i32
    %c0_i32_1 = arith.constant 0 : i32
    return %c0_i32, %c0_i32_0 : i32, i32
  }
  func.func @transform_7(%arg0: i32) -> (i32, i32) {
    %c0_i32 = arith.constant 0 : i32
    %c0_i32_0 = arith.constant 0 : i32
    return %arg0, %c0_i32 : i32, i32
  }
}

</mosaic_0001>

<llo_original>
// kernel: score_forward.1
$region0: #{score_forward.1}
  #allocation0 [shape = 'u32[]', space=smem, size = 0x4, offset = 0x4, fixed_abs, tag = 'smem constant byte address 0x4 - core index']
  #allocation1 [shape = 'u32[144,128]{1,0:T(1,128)}', space=vmem, size = 0x12000, scoped, tag = 'internal scratch']
  %s0 = inlined_call_operand.vmem [shape: f32[4,10], index: 0, kind: input, shape index: {}]
  %s1 = inlined_call_operand.vmem [shape: f32[10,128], index: 1, kind: input, shape index: {}]
  %s2 = inlined_call_operand.vmem [shape: f32[128,128], index: 2, kind: input, shape index: {}]
  %s3 = inlined_call_operand.hbm [shape: f32[128,128], index: 3, kind: input, shape index: {}]
  %s4 = inlined_call_operand.vmem [shape: f32[128,8], index: 4, kind: input, shape index: {}]
  %s5 = inlined_call_operand.vmem [shape: f32[3,128], index: 5, kind: input, shape index: {}]
  %s6 = inlined_call_operand.vmem [shape: f32[1,8], index: 6, kind: input, shape index: {}]
  %s7 = inlined_call_operand.vmem [shape: f32[4,8], index: 7, kind: output, shape index: {}]
  %s8 = sld [smem:[#allocation0]]
  $region42: #{score_forward.1} parent=0
    _
  %s10 = ssub.s32 1, %s8
  %s11 = scalar_select 0, %s10, %s8
  $region1: #{score_forward.1} parent=0
    #allocation2 [shape = 'u8[65536]{0}', space=vmem, size = 0x10000, scoped, tag = 'input window, operand 3, single buffered']
    #allocation3 [shape = 's32[1]{0}', space=sflag, size = 0x4, scoped, tag = 'scoped memory for score_forward.1']
    %12 = vsyncpa [#allocation3], 0
    // Predicated region
    $region2: #{score_forward.1} parent=1 // pred_check
      _
    $region3: #{score_forward.1} parent=1 // pred_check_branch
      %14 = sbr.rel (0) target = $region5
    $region4: #{score_forward.1} parent=1 // pred_region
      _
    $region5: #{score_forward.1} parent=1 // pred_fallthru
      _
    // Predicated region
    $region6: #{score_forward.1} parent=1 // pred_check
      _
    $region7: #{score_forward.1} parent=1 // pred_check_branch
      %16 = sbr.rel (0) target = $region9
    $region8: #{score_forward.1} parent=1 // pred_region
      _
    $region9: #{score_forward.1} parent=1 // pred_fallthru
      _
    // Predicated region
    $region10: #{score_forward.1} parent=1 // pred_check
      _
    $region11: #{score_forward.1} parent=1 // pred_check_branch
      %18 = sbr.rel (0) target = $region13
    $region12: #{score_forward.1} parent=1 // pred_region
      _
    $region13: #{score_forward.1} parent=1 // pred_fallthru
      _
    // Predicated region
    $region14: #{score_forward.1} parent=1 // pred_check
      _
    $region15: #{score_forward.1} parent=1 // pred_check_branch
      %20 = sbr.rel (0) target = $region17
    $region16: #{score_forward.1} parent=1 // pred_region
      %s22 = ssub.s32 2048, 2048
      %23 = vsyncadd [#allocation3], %s22
      %s24 = sshll.u32 [#allocation2], 4
      %s25 = int_to_ptr.vmem [resolvable:$true] %s24
      %30 = dma.hbm_to_vmem [thread:$0]  %s3, 2048, %s25, [#allocation3], 128, 128, 8
    $region17: #{score_forward.1} parent=1 // pred_fallthru
      _
    // Predicated region
    $region18: #{score_forward.1} parent=1 // pred_check
      _
    $region19: #{score_forward.1} parent=1 // pred_check_branch
      %32 = sbr.rel (0) target = $region21
    $region20: #{score_forward.1} parent=1 // pred_region
      _
    $region21: #{score_forward.1} parent=1 // pred_fallthru
      _
    // Predicated region
    $region22: #{score_forward.1} parent=1 // pred_check
      _
    $region23: #{score_forward.1} parent=1 // pred_check_branch
      %34 = sbr.rel (0) target = $region25
    $region24: #{score_forward.1} parent=1 // pred_region
      _
    $region25: #{score_forward.1} parent=1 // pred_fallthru
      _
    // Predicated region
    $region26: #{score_forward.1} parent=1 // pred_check
      _
    $region27: #{score_forward.1} parent=1 // pred_check_branch
      %36 = sbr.rel (0) target = $region29
    $region28: #{score_forward.1} parent=1 // pred_region
      _
    $region29: #{score_forward.1} parent=1 // pred_fallthru
      _
    // Predicated region
    $region30: #{score_forward.1} parent=1 // pred_check
      _
    $region31: #{score_forward.1} parent=1 // pred_check_branch
      %38 = sbr.rel (0) target = $region33
    $region32: #{score_forward.1} parent=1 // pred_region
      %39 = dma.done [#allocation3], 2048
    $region33: #{score_forward.1} parent=1 // pred_fallthru
      _
    %v40 = vld [vmem:[%s0] sm:$0xf]
    %v41 = vld [vmem:[%s1] sm:$0xff]
    %v42 = vld [vmem:[%s1 + $0x8] sm:$0x3]
    %v43 = vld [vmem:[%s5] sm:$0x1]
    %v44 = vlaneseq
    %v45 = vshrl.u32 %v44, 7
    %v46 = vsub.s32 0, %v45
    %v47 = vrot.slane %v43, %v46
    %vm48 = vcmask 80896
    %v50 = vsel %vm48, %v40, 0
    %vm52 = vcmask 1041408
    %v54 = vsel %vm52, %v42, 0
    %56 = vmatprep.subr.mxu0 0.0
    %57 = vmatpush1.msra.mxu0 %v41
    %58 = vmatprep.subr.mxu0 0.0
    %59 = vmatpush1.msra.mxu0 %v54
    %60 = vmatprep.subr.mxu0 0.0
    %61 = vmatpush1.msra.mxu0 0.0
    %62 = vmatprep.subr.mxu0 0.0
    %63 = vmatpush1.msra.mxu0 0.0
    %64 = vmatprep.subr.mxu0 0.0
    %65 = vmatpush1.msra.mxu0 0.0
    %66 = vmatprep.subr.mxu0 0.0
    %67 = vmatpush1.msra.mxu0 0.0
    %68 = vmatprep.subr.mxu0 0.0
    %69 = vmatpush1.msra.mxu0 0.0
    %70 = vmatprep.subr.mxu0 0.0
    %71 = vmatpush1.msra.mxu0 0.0
    %72 = vmatprep.subr.mxu0 0.0
    %73 = vmatpush1.msra.mxu0 0.0
    %74 = vmatprep.subr.mxu0 0.0
    %75 = vmatpush1.msra.mxu0 0.0
    %76 = vmatprep.subr.mxu0 0.0
    %77 = vmatpush1.msra.mxu0 0.0
    %78 = vmatprep.subr.mxu0 0.0
    %79 = vmatpush1.msra.mxu0 0.0
    %80 = vmatprep.subr.mxu0 0.0
    %81 = vmatpush1.msra.mxu0 0.0
    %82 = vmatprep.subr.mxu0 0.0
    %83 = vmatpush1.msra.mxu0 0.0
    %84 = vmatprep.subr.mxu0 0.0
    %85 = vmatpush1.msra.mxu0 0.0
    %86 = vmatprep.subr.mxu0 0.0
    %87 = vmatpush1.msra.mxu0 0.0
    %88 = vmatprep.subr.mxu0 0.0
    %89 = vmatpush1.msra.mxu0 0.0
    %90 = vmatprep.subr.mxu0 0.0
    %91 = vmatpush1.msra.mxu0 0.0
    %92 = vmatprep.subr.mxu0 0.0
    %93 = vmatpush1.msra.mxu0 0.0
    %94 = vmatprep.subr.mxu0 0.0
    %95 = vmatpush1.msra.mxu0 0.0
    %96 = vmatprep.subr.mxu0 0.0
    %97 = vmatpush1.msra.mxu0 0.0
    %98 = vmatprep.subr.mxu0 0.0
    %99 = vmatpush1.msra.mxu0 0.0
    %100 = vmatprep.subr.mxu0 0.0
    %101 = vmatpush1.msra.mxu0 0.0
    %102 = vmatprep.subr.mxu0 0.0
    %103 = vmatpush1.msra.mxu0 0.0
    %104 = vmatprep.subr.mxu0 0.0
    %105 = vmatpush1.msra.mxu0 0.0
    %106 = vmatprep.subr.mxu0 0.0
    %107 = vmatpush1.msra.mxu0 0.0
    %108 = vmatprep.subr.mxu0 0.0
    %109 = vmatpush1.msra.mxu0 0.0
    %110 = vmatprep.subr.mxu0 0.0
    %111 = vmatpush1.msra.mxu0 0.0
    %112 = vmatprep.subr.mxu0 0.0
    %113 = vmatpush1.msra.mxu0 0.0
    %114 = vmatprep.subr.mxu0 0.0
    %115 = vmatpush1.msra.mxu0 0.0
    %116 = vmatprep.subr.mxu0 0.0
    %117 = vmatpush1.msra.mxu0 0.0
    %118 = vmatprep.subr.mxu0 0.0
    %119 = vmatpush1.msra.mxu0 0.0
    %120 = vmatprep.mubr.f32.mxu0 0.0
    %121 = vmatmul.mubr.f32.gmra.mrb[0].mxu0 %v50
    %v122 = vpop.f32.mrb[0].mxu0
    %v123 = vadd.f32 %v47, %v122
    %v124 = vpop.f32.mrb[0].mxu0
    %125 = vdwg.mxu0
    %v126 = vmin.f32 %v123, 0.0
    %v127 = vand.u32 2147483647, %v123
    %v128 = vsub.f32 0.0, %v127
    %v129 = vmul.f32 %v128, 1.442695
    %v130 = vpow.pop %v129
    %v131 = vadd.f32 %v130, 1.0
    %v132 = vlog2.pop %v131
    %v133 = vmul.f32 %v132, 0.6931472
    %v134 = vmul.f32 -0.5, %v130
    %v135 = vadd.f32 %v134, 1.0
    %v136 = vmul.f32 %v135, %v130
    %v137 = vand.u32 2147483647, %v130
    %vm138 = vcmp.lt.f32.partialorder %v137, 0.0004427343
    %v139 = vsel %vm138, %v136, %v133
    %v140 = vsub.f32 %v126, %v139
    %v141 = vld [vmem:[%s2] sm:$0xff]
    %v142 = vld [vmem:[%s2 + $0x8] sm:$0xff]
    %v143 = vld [vmem:[%s2 + $0x10] sm:$0xff]
    %v144 = vld [vmem:[%s2 + $0x18] sm:$0xff]
    %v145 = vld [vmem:[%s2 + $0x20] sm:$0xff]
    %v146 = vld [vmem:[%s2 + $0x28] sm:$0xff]
    %v147 = vld [vmem:[%s2 + $0x30] sm:$0xff]
    %v148 = vld [vmem:[%s2 + $0x38] sm:$0xff]
    %v149 = vld [vmem:[%s2 + $0x40] sm:$0xff]
    %v150 = vld [vmem:[%s2 + $0x48] sm:$0xff]
    %v151 = vld [vmem:[%s2 + $0x50] sm:$0xff]
    %v152 = vld [vmem:[%s2 + $0x58] sm:$0xff]
    %v153 = vld [vmem:[%s2 + $0x60] sm:$0xff]
    %v154 = vld [vmem:[%s2 + $0x68] sm:$0xff]
    %v155 = vld [vmem:[%s2 + $0x70] sm:$0xff]
    %v156 = vld [vmem:[%s2 + $0x78] sm:$0xff]
    %v157 = vld [vmem:[%s5 + $0x1] sm:$0x1]
    %v158 = vlaneseq
    %v159 = vshrl.u32 %v158, 7
    %v160 = vsub.s32 0, %v159
    %v161 = vrot.slane %v157, %v160
    %162 = vmatprep.subr.mxu0 0.0
    %163 = vmatpush1.msra.mxu0 %v141
    %164 = vmatprep.subr.mxu0 0.0
    %165 = vmatpush1.msra.mxu0 %v142
    %166 = vmatprep.subr.mxu0 0.0
    %167 = vmatpush1.msra.mxu0 %v143
    %168 = vmatprep.subr.mxu0 0.0
    %169 = vmatpush1.msra.mxu0 %v144
    %170 = vmatprep.subr.mxu0 0.0
    %171 = vmatpush1.msra.mxu0 %v145
    %172 = vmatprep.subr.mxu0 0.0
    %173 = vmatpush1.msra.mxu0 %v146
    %174 = vmatprep.subr.mxu0 0.0
    %175 = vmatpush1.msra.mxu0 %v147
    %176 = vmatprep.subr.mxu0 0.0
    %177 = vmatpush1.msra.mxu0 %v148
    %178 = vmatprep.subr.mxu0 0.0
    %179 = vmatpush1.msra.mxu0 %v149
    %180 = vmatprep.subr.mxu0 0.0
    %181 = vmatpush1.msra.mxu0 %v150
    %182 = vmatprep.subr.mxu0 0.0
    %183 = vmatpush1.msra.mxu0 %v151
    %184 = vmatprep.subr.mxu0 0.0
    %185 = vmatpush1.msra.mxu0 %v152
    %186 = vmatprep.subr.mxu0 0.0
    %187 = vmatpush1.msra.mxu0 %v153
    %188 = vmatprep.subr.mxu0 0.0
    %189 = vmatpush1.msra.mxu0 %v154
    %190 = vmatprep.subr.mxu0 0.0
    %191 = vmatpush1.msra.mxu0 %v155
    %192 = vmatprep.subr.mxu0 0.0
    %193 = vmatpush1.msra.mxu0 %v156
    %194 = vmatprep.subr.mxu0 0.0
    %195 = vmatpush1.msra.mxu0 0.0
    %196 = vmatprep.subr.mxu0 0.0
    %197 = vmatpush1.msra.mxu0 0.0
    %198 = vmatprep.subr.mxu0 0.0
    %199 = vmatpush1.msra.mxu0 0.0
    %200 = vmatprep.subr.mxu0 0.0
    %201 = vmatpush1.msra.mxu0 0.0
    %202 = vmatprep.subr.mxu0 0.0
    %203 = vmatpush1.msra.mxu0 0.0
    %204 = vmatprep.subr.mxu0 0.0
    %205 = vmatpush1.msra.mxu0 0.0
    %206 = vmatprep.subr.mxu0 0.0
    %207 = vmatpush1.msra.mxu0 0.0
    %208 = vmatprep.subr.mxu0 0.0
    %209 = vmatpush1.msra.mxu0 0.0
    %210 = vmatprep.subr.mxu0 0.0
    %211 = vmatpush1.msra.mxu0 0.0
    %212 = vmatprep.subr.mxu0 0.0
    %213 = vmatpush1.msra.mxu0 0.0
    %214 = vmatprep.subr.mxu0 0.0
    %215 = vmatpush1.msra.mxu0 0.0
    %216 = vmatprep.subr.mxu0 0.0
    %217 = vmatpush1.msra.mxu0 0.0
    %218 = vmatprep.subr.mxu0 0.0
    %219 = vmatpush1.msra.mxu0 0.0
    %220 = vmatprep.subr.mxu0 0.0
    %221 = vmatpush1.msra.mxu0 0.0
    %222 = vmatprep.subr.mxu0 0.0
    %223 = vmatpush1.msra.mxu0 0.0
    %224 = vmatprep.subr.mxu0 0.0
    %225 = vmatpush1.msra.mxu0 0.0
    %226 = vmatprep.mubr.f32.mxu0 0.0
    %227 = vmatmul.mubr.f32.gmra.mrb[0].mxu0 %v140
    %v228 = vpop.f32.mrb[0].mxu0
    %v229 = vadd.f32 %v161, %v228
    %v230 = vpop.f32.mrb[0].mxu0
    %231 = vdwg.mxu0
    %v232 = vmin.f32 %v229, 0.0
    %v233 = vand.u32 2147483647, %v229
    %v234 = vsub.f32 0.0, %v233
    %v235 = vmul.f32 %v234, 1.442695
    %v236 = vpow.pop %v235
    %v237 = vadd.f32 %v236, 1.0
    %v238 = vlog2.pop %v237
    %v239 = vmul.f32 %v238, 0.6931472
    %v240 = vmul.f32 -0.5, %v236
    %v241 = vadd.f32 %v240, 1.0
    %v242 = vmul.f32 %v241, %v236
    %v243 = vand.u32 2147483647, %v236
    %vm244 = vcmp.lt.f32.partialorder %v243, 0.0004427343
    %v245 = vsel %vm244, %v242, %v239
    %v246 = vsub.f32 %v232, %v245
    %v247 = vld [vmem:[#allocation2] sm:$0xff]
    %v248 = vld [vmem:[#allocation2 + $0x8] sm:$0xff]
    %v249 = vld [vmem:[#allocation2 + $0x10] sm:$0xff]
    %v250 = vld [vmem:[#allocation2 + $0x18] sm:$0xff]
    %v251 = vld [vmem:[#allocation2 + $0x20] sm:$0xff]
    %v252 = vld [vmem:[#allocation2 + $0x28] sm:$0xff]
    %v253 = vld [vmem:[#allocation2 + $0x30] sm:$0xff]
    %v254 = vld [vmem:[#allocation2 + $0x38] sm:$0xff]
    %v255 = vld [vmem:[#allocation2 + $0x40] sm:$0xff]
    %v256 = vld [vmem:[#allocation2 + $0x48] sm:$0xff]
    %v257 = vld [vmem:[#allocation2 + $0x50] sm:$0xff]
    %v258 = vld [vmem:[#allocation2 + $0x58] sm:$0xff]
    %v259 = vld [vmem:[#allocation2 + $0x60] sm:$0xff]
    %v260 = vld [vmem:[#allocation2 + $0x68] sm:$0xff]
    %v261 = vld [vmem:[#allocation2 + $0x70] sm:$0xff]
    %v262 = vld [vmem:[#allocation2 + $0x78] sm:$0xff]
    %v263 = vld [vmem:[%s5 + $0x2] sm:$0x1]
    %v264 = vlaneseq
    %v265 = vshrl.u32 %v264, 7
    %v266 = vsub.s32 0, %v265
    %v267 = vrot.slane %v263, %v266
    %268 = vmatprep.subr.mxu0 0.0
    %269 = vmatpush1.msra.mxu0 %v247
    %270 = vmatprep.subr.mxu0 0.0
    %271 = vmatpush1.msra.mxu0 %v248
    %272 = vmatprep.subr.mxu0 0.0
    %273 = vmatpush1.msra.mxu0 %v249
    %274 = vmatprep.subr.mxu0 0.0
    %275 = vmatpush1.msra.mxu0 %v250
    %276 = vmatprep.subr.mxu0 0.0
    %277 = vmatpush1.msra.mxu0 %v251
    %278 = vmatprep.subr.mxu0 0.0
    %279 = vmatpush1.msra.mxu0 %v252
    %280 = vmatprep.subr.mxu0 0.0
    %281 = vmatpush1.msra.mxu0 %v253
    %282 = vmatprep.subr.mxu0 0.0
    %283 = vmatpush1.msra.mxu0 %v254
    %284 = vmatprep.subr.mxu0 0.0
    %285 = vmatpush1.msra.mxu0 %v255
    %286 = vmatprep.subr.mxu0 0.0
    %287 = vmatpush1.msra.mxu0 %v256
    %288 = vmatprep.subr.mxu0 0.0
    %289 = vmatpush1.msra.mxu0 %v257
    %290 = vmatprep.subr.mxu0 0.0
    %291 = vmatpush1.msra.mxu0 %v258
    %292 = vmatprep.subr.mxu0 0.0
    %293 = vmatpush1.msra.mxu0 %v259
    %294 = vmatprep.subr.mxu0 0.0
    %295 = vmatpush1.msra.mxu0 %v260
    %296 = vmatprep.subr.mxu0 0.0
    %297 = vmatpush1.msra.mxu0 %v261
    %298 = vmatprep.subr.mxu0 0.0
    %299 = vmatpush1.msra.mxu0 %v262
    %300 = vmatprep.subr.mxu0 0.0
    %301 = vmatpush1.msra.mxu0 0.0
    %302 = vmatprep.subr.mxu0 0.0
    %303 = vmatpush1.msra.mxu0 0.0
    %304 = vmatprep.subr.mxu0 0.0
    %305 = vmatpush1.msra.mxu0 0.0
    %306 = vmatprep.subr.mxu0 0.0
    %307 = vmatpush1.msra.mxu0 0.0
    %308 = vmatprep.subr.mxu0 0.0
    %309 = vmatpush1.msra.mxu0 0.0
    %310 = vmatprep.subr.mxu0 0.0
    %311 = vmatpush1.msra.mxu0 0.0
    %312 = vmatprep.subr.mxu0 0.0
    %313 = vmatpush1.msra.mxu0 0.0
    %314 = vmatprep.subr.mxu0 0.0
    %315 = vmatpush1.msra.mxu0 0.0
    %316 = vmatprep.subr.mxu0 0.0
    %317 = vmatpush1.msra.mxu0 0.0
    %318 = vmatprep.subr.mxu0 0.0
    %319 = vmatpush1.msra.mxu0 0.0
    %320 = vmatprep.subr.mxu0 0.0
    %321 = vmatpush1.msra.mxu0 0.0
    %322 = vmatprep.subr.mxu0 0.0
    %323 = vmatpush1.msra.mxu0 0.0
    %324 = vmatprep.subr.mxu0 0.0
    %325 = vmatpush1.msra.mxu0 0.0
    %326 = vmatprep.subr.mxu0 0.0
    %327 = vmatpush1.msra.mxu0 0.0
    %328 = vmatprep.subr.mxu0 0.0
    %329 = vmatpush1.msra.mxu0 0.0
    %330 = vmatprep.subr.mxu0 0.0
    %331 = vmatpush1.msra.mxu0 0.0
    %332 = vmatprep.mubr.f32.mxu0 0.0
    %333 = vmatmul.mubr.f32.gmra.mrb[0].mxu0 %v246
    %v334 = vpop.f32.mrb[0].mxu0
    %v335 = vadd.f32 %v267, %v334
    %v336 = vpop.f32.mrb[0].mxu0
    %337 = vdwg.mxu0
    %v338 = vmin.f32 %v335, 0.0
    %v339 = vand.u32 2147483647, %v335
    %v340 = vsub.f32 0.0, %v339
    %v341 = vmul.f32 %v340, 1.442695
    %v342 = vpow.pop %v341
    %v343 = vadd.f32 %v342, 1.0
    %v344 = vlog2.pop %v343
    %v345 = vmul.f32 %v344, 0.6931472
    %v346 = vmul.f32 -0.5, %v342
    %v347 = vadd.f32 %v346, 1.0
    %v348 = vmul.f32 %v347, %v342
    %v349 = vand.u32 2147483647, %v342
    %vm350 = vcmp.lt.f32.partialorder %v349, 0.0004427343
    %v351 = vsel %vm350, %v348, %v345
    %v352 = vsub.f32 %v338, %v351
    %v353 = vld [vmem:[%s4] sm:$0xff]
    %v354 = vld [vmem:[%s4 + $0x8] sm:$0xff]
    %v355 = vld [vmem:[%s4 + $0x10] sm:$0xff]
    %v356 = vld [vmem:[%s4 + $0x18] sm:$0xff]
    %v357 = vld [vmem:[%s4 + $0x20] sm:$0xff]
    %v358 = vld [vmem:[%s4 + $0x28] sm:$0xff]
    %v359 = vld [vmem:[%s4 + $0x30] sm:$0xff]
    %v360 = vld [vmem:[%s4 + $0x38] sm:$0xff]
    %v361 = vld [vmem:[%s4 + $0x40] sm:$0xff]
    %v362 = vld [vmem:[%s4 + $0x48] sm:$0xff]
    %v363 = vld [vmem:[%s4 + $0x50] sm:$0xff]
    %v364 = vld [vmem:[%s4 + $0x58] sm:$0xff]
    %v365 = vld [vmem:[%s4 + $0x60] sm:$0xff]
    %v366 = vld [vmem:[%s4 + $0x68] sm:$0xff]
    %v367 = vld [vmem:[%s4 + $0x70] sm:$0xff]
    %v368 = vld [vmem:[%s4 + $0x78] sm:$0xff]
    %v369 = vld [vmem:[%s6] sm:$0x1]
    %v371 = vlaneseq
    %v372 = vshrl.u32 %v371, 7
    %v373 = vsub.s32 0, %v372
    %v374 = vrot.slane %v369, %v373
    %376 = vmatprep.subr.mxu0 0.0
    %377 = vmatpush1.msra.mxu0 %v353
    %378 = vmatprep.subr.mxu0 0.0
    %379 = vmatpush1.msra.mxu0 %v354
    %380 = vmatprep.subr.mxu0 0.0
    %381 = vmatpush1.msra.mxu0 %v355
    %382 = vmatprep.subr.mxu0 0.0
    %383 = vmatpush1.msra.mxu0 %v356
    %384 = vmatprep.subr.mxu0 0.0
    %385 = vmatpush1.msra.mxu0 %v357
    %386 = vmatprep.subr.mxu0 0.0
    %387 = vmatpush1.msra.mxu0 %v358
    %388 = vmatprep.subr.mxu0 0.0
    %389 = vmatpush1.msra.mxu0 %v359
    %390 = vmatprep.subr.mxu0 0.0
    %391 = vmatpush1.msra.mxu0 %v360
    %392 = vmatprep.subr.mxu0 0.0
    %393 = vmatpush1.msra.mxu0 %v361
    %394 = vmatprep.subr.mxu0 0.0
    %395 = vmatpush1.msra.mxu0 %v362
    %396 = vmatprep.subr.mxu0 0.0
    %397 = vmatpush1.msra.mxu0 %v363
    %398 = vmatprep.subr.mxu0 0.0
    %399 = vmatpush1.msra.mxu0 %v364
    %400 = vmatprep.subr.mxu0 0.0
    %401 = vmatpush1.msra.mxu0 %v365
    %402 = vmatprep.subr.mxu0 0.0
    %403 = vmatpush1.msra.mxu0 %v366
    %404 = vmatprep.subr.mxu0 0.0
    %405 = vmatpush1.msra.mxu0 %v367
    %406 = vmatprep.subr.mxu0 0.0
    %407 = vmatpush1.msra.mxu0 %v368
    %408 = vmatprep.subr.mxu0 0.0
    %409 = vmatpush1.msra.mxu0 0.0
    %410 = vmatprep.subr.mxu0 0.0
    %411 = vmatpush1.msra.mxu0 0.0
    %412 = vmatprep.subr.mxu0 0.0
    %413 = vmatpush1.msra.mxu0 0.0
    %414 = vmatprep.subr.mxu0 0.0
    %415 = vmatpush1.msra.mxu0 0.0
    %416 = vmatprep.subr.mxu0 0.0
    %417 = vmatpush1.msra.mxu0 0.0
    %418 = vmatprep.subr.mxu0 0.0
    %419 = vmatpush1.msra.mxu0 0.0
    %420 = vmatprep.subr.mxu0 0.0
    %421 = vmatpush1.msra.mxu0 0.0
    %422 = vmatprep.subr.mxu0 0.0
    %423 = vmatpush1.msra.mxu0 0.0
    %424 = vmatprep.subr.mxu0 0.0
    %425 = vmatpush1.msra.mxu0 0.0
    %426 = vmatprep.subr.mxu0 0.0
    %427 = vmatpush1.msra.mxu0 0.0
    %428 = vmatprep.subr.mxu0 0.0
    %429 = vmatpush1.msra.mxu0 0.0
    %430 = vmatprep.subr.mxu0 0.0
    %431 = vmatpush1.msra.mxu0 0.0
    %432 = vmatprep.subr.mxu0 0.0
    %433 = vmatpush1.msra.mxu0 0.0
    %434 = vmatprep.subr.mxu0 0.0
    %435 = vmatpush1.msra.mxu0 0.0
    %436 = vmatprep.subr.mxu0 0.0
    %437 = vmatpush1.msra.mxu0 0.0
    %438 = vmatprep.subr.mxu0 0.0
    %439 = vmatpush1.msra.mxu0 0.0
    %440 = vmatprep.mubr.f32.mxu0 0.0
    %441 = vmatmul.mubr.f32.gmra.mrb[0].mxu0 %v352
    %v442 = vpop.f32.mrb[0].mxu0
    %v443 = vadd.f32 %v374, %v442
    %v444 = vpop.f32.mrb[0].mxu0
    %445 = vdwg.mxu0
    %vm446 = vcmask 60416
    %447 = vst.msk [vmem:[%s7] sm:$0xf] %vm446, %v443
    // Predicated region
    $region34: #{score_forward.1} parent=1 // pred_check
      _
    $region35: #{score_forward.1} parent=1 // pred_check_branch
      %449 = sbr.rel (0) target = $region37
    $region36: #{score_forward.1} parent=1 // pred_region
      _
    $region37: #{score_forward.1} parent=1 // pred_fallthru
      _
    // Predicated region
    $region38: #{score_forward.1} parent=1 // pred_check
      _
    $region39: #{score_forward.1} parent=1 // pred_check_branch
      %451 = sbr.rel (0) target = $region41
    $region40: #{score_forward.1} parent=1 // pred_region
      _
    $region41: #{score_forward.1} parent=1 // pred_fallthru
      _
    %452 = vsyncpa [#allocation3], 1

</llo_original>
